<compile_context>
chip_gen: v7x
topology: tpu7x:2x2x1
jax: 0.10.0
libtpu: 0.0.40
codegen_flags: <defaults>
</compile_context>

<pallas_src>
import jax
import jax.numpy as jnp
from jax.experimental import pallas as pl
from jax.experimental.pallas import tpu as pltpu


# ----------------------------------------------------------------------------
# Chip-dependent configuration
# ----------------------------------------------------------------------------

def _chip_config():
    try:
        info = pltpu.get_tpu_info()
        vmem_phys = int(getattr(info, "vmem_capacity_bytes", 0))
    except Exception:
        vmem_phys = 0
    if vmem_phys and vmem_phys <= 64 * 1024 * 1024:
        # v7x-class TensorCore: 64 MiB physical VMEM -> leave headroom, modest tiles.
        return {"vmem_limit": 44 * 1024 * 1024, "tile_t_target": 64,
                "tile_rows_target": 512}
    if vmem_phys >= 96 * 1024 * 1024:
        # v5e / v6e: 128 MiB physical VMEM -> larger streamed tiles.
        return {"vmem_limit": 100 * 1024 * 1024, "tile_t_target": 128,
                "tile_rows_target": 1024}
    # Unknown chip -> conservative defaults that work everywhere.
    return {"vmem_limit": 48 * 1024 * 1024, "tile_t_target": 64,
            "tile_rows_target": 512}


# ----------------------------------------------------------------------------
# Pallas kernels
# ----------------------------------------------------------------------------

def _lstm_inproj_kernel(x_ref, w_ref, gf_ref, gb_ref):
    """Hoisted LSTM input projection for both directions.

    x_ref: (TILE_R, C) rows of the (T*B, C) input (t-major, b-minor)
    w_ref: (C, 8H) = [W_i_fwd | W_i_bwd] (content part only)
    gf_ref/gb_ref: (TILE_R, 4H) per-direction x-part gate pre-activations.
    """
    g = jnp.dot(x_ref[...].astype(w_ref.dtype), w_ref[...],
                preferred_element_type=jnp.float32)
    G = gf_ref.shape[1]
    gf_ref[...] = g[:, :G]
    gb_ref[...] = g[:, G:]


def _bilstm_rec_kernel(gxf_ref, gxb_ref, v_ref, wh_ref, b_ref,
                       yf_ref, yb_ref, h_sc, c_sc, gx_sc):
    """Fused bidirectional LSTM recurrence over one time chunk.

    Both directions are carried as one stacked state (2B, H): rows [:B] are the
    forward direction at global time s, rows [B:] the backward direction at
    global time T-1-s.  One matmul per step against [W_hf | W_hb] feeds both.

    gxf_ref: (tile_t*B, 4H) forward  x@W_i gate terms (chunk i, forward order)
    gxb_ref: (tile_t*B, 4H) backward x@W_i gate terms (mirrored chunk nc-1-i)
    v_ref:   (tile_t*2B, 1) validity rows [fwd valid(s) ; bwd valid(T-1-s)]
    wh_ref:  (H, 8H) = [W_hf | W_hb];  b_ref: (2B, 4H) gate bias (incl. style)
    yf_ref/yb_ref: (tile_t*B, H) direction outputs (natural forward time order)
    h_sc/c_sc: (2B, H) carried state;  gx_sc: (2B, 4H) per-step staging buffer.
    """
    RB, G = gxf_ref.shape
    B2 = b_ref.shape[0]
    B = B2 // 2
    H = G // 4
    TT = RB // B

    @pl.when(pl.program_id(0) == 0)
    def _init():
        h_sc[...] = jnp.zeros_like(h_sc)
        c_sc[...] = jnp.zeros_like(c_sc)

    wh = wh_ref[...]                                                  # (H, 2G)
    bias = b_ref[...]                                                 # (2B, G)
    rmask = jax.lax.broadcasted_iota(jnp.int32, (B2, 1), 0) < B       # fwd rows

    def step(t, carry):
        h, c = carry                                                  # (2B, H)
        rf = pl.multiple_of(t * B, B)                    # fwd rows, time t
        rb = pl.multiple_of((TT - 1 - t) * B, B)         # bwd rows, reversed time
        # Stage both directions' x-projected gates into one dense (2B, G) block.
        gx_sc[0:B, :] = gxf_ref[pl.ds(rf, B), :]
        gx_sc[B:, :] = gxb_ref[pl.ds(rb, B), :]
        vt = v_ref[pl.ds(pl.multiple_of(t * B2, B2), B2), :]          # (2B, 1)
        hw = jnp.dot(h.astype(wh.dtype), wh,
                     preferred_element_type=jnp.float32)              # (2B, 2G)
        gates = gx_sc[...] + bias + jnp.where(rmask, hw[:, :G], hw[:, G:])
        i_g = jax.nn.sigmoid(gates[:, 0:H])
        f_g = jax.nn.sigmoid(gates[:, H:2 * H])
        g_g = jnp.tanh(gates[:, 2 * H:3 * H])
        o_g = jax.nn.sigmoid(gates[:, 3 * H:4 * H])
        c1 = f_g * c + i_g * g_g
        h1 = o_g * jnp.tanh(c1)
        # packed-sequence semantics: zero state / outputs beyond each length
        h_new = h1 * vt
        c_new = c1 * vt
        yf_ref[pl.ds(rf, B), :] = h_new[:B]
        yb_ref[pl.ds(rb, B), :] = h_new[B:]
        return (h_new, c_new)

    h, c = jax.lax.fori_loop(0, TT, step, (h_sc[...], c_sc[...]), unroll=4)
    h_sc[...] = h
    c_sc[...] = c


def _adaln_kernel(yf_ref, yb_ref, g_ref, b_ref, o_ref):
    """AdaLayerNorm over channels C = 2H without materializing concat([yf, yb]).

    yf_ref/yb_ref: (TILE_R, H) LSTM direction outputs (rows = (t, b) pairs)
    g_ref/b_ref: (TILE_R, C) gamma/beta pre-tiled to the row-block pattern
    o_ref: (TILE_R, C)
    """
    yf = yf_ref[...]
    yb = yb_ref[...]
    H = yf.shape[-1]
    C = 2 * H
    inv_c = 1.0 / C
    mean = (jnp.sum(yf, axis=-1, keepdims=True)
            + jnp.sum(yb, axis=-1, keepdims=True)) * inv_c
    df = yf - mean
    db = yb - mean
    var = (jnp.sum(df * df, axis=-1, keepdims=True)
           + jnp.sum(db * db, axis=-1, keepdims=True)) * inv_c
    inv = jax.lax.rsqrt(var + 1e-5)
    o_ref[:, :H] = (1.0 + g_ref[:, :H]) * (df * inv) + b_ref[:, :H]
    o_ref[:, H:] = (1.0 + g_ref[:, H:]) * (db * inv) + b_ref[:, H:]


def _duration_kernel(yf_ref, yb_ref, wf_ref, wb_ref, b_ref, o_ref):
    """Duration head fused as elementwise-mul + lane reduce (no N=1 matmul).

    yf_ref/yb_ref: (TILE_R, H); wf/wb: (1, H); b: (1, 1); o: (TILE_R, 1)
    """
    d = (jnp.sum(yf_ref[...] * wf_ref[...], axis=-1, keepdims=True)
         + jnp.sum(yb_ref[...] * wb_ref[...], axis=-1, keepdims=True))
    o_ref[...] = d + b_ref[...]


def _en_kernel(c_ref, s_ref, v_ref, a_ref, o_ref):
    """en = d^T @ alignment per batch with mask + style-concat fused in.

    Standard (minor-dim) contraction only -- no transposed-LHS dot.
    c_ref: (1, C, T) content; s_ref: (1, S, 1) style column;
    v_ref: (1, 1, T) validity; a_ref: (1, T, Ta); o_ref: (1, C+S, Ta)
    """
    C = c_ref.shape[1]
    v = v_ref[0]                                   # (1, T)
    dc = c_ref[0] * v                              # (C, T) masked content
    a = a_ref[0]                                   # (T, Ta)
    o_ref[0, :C, :] = jnp.dot(dc, a, preferred_element_type=jnp.float32)
    va = jnp.dot(v, a, preferred_element_type=jnp.float32)    # (1, Ta)
    o_ref[0, C:, :] = s_ref[0] * va                # (S,1)*(1,Ta) outer product


def _linear_kernel(x_ref, w_ref, b_ref, o_ref):
    """o = x @ w + b  (tiny style projections: gate biases, AdaLN gamma/beta)."""
    o_ref[...] = (jnp.dot(x_ref[...], w_ref[...],
                          preferred_element_type=jnp.float32) + b_ref[...])


# ----------------------------------------------------------------------------
# Tiling helpers
# ----------------------------------------------------------------------------

def _pick_tile_t(T, target):
    """Largest time-chunk <= target that divides T (multiple of 8), else T."""
    if T <= target:
        return T
    for cand in range(target - target % 8, 7, -8):
        if T % cand == 0:
            return cand
    return T


def _pick_tile_rows(rows, chunk_rows, target):
    """Largest multiple of chunk_rows dividing rows, <= target (>= chunk_rows)."""
    n_chunks = rows // chunk_rows
    best = chunk_rows
    for m in range(1, n_chunks + 1):
        if n_chunks % m == 0 and m * chunk_rows <= target:
            best = m * chunk_rows
    return best


# ----------------------------------------------------------------------------
# Wrappers
# ----------------------------------------------------------------------------

def linear(x, w, b, cfg):
    return pl.pallas_call(
        _linear_kernel,
        out_shape=jax.ShapeDtypeStruct((x.shape[0], w.shape[1]), jnp.float32),
        compiler_params=pltpu.CompilerParams(
            vmem_limit_bytes=cfg["vmem_limit"]),
    )(x, w, b)


def bilstm(content_rows, valid_comb, lp, bias_comb, T, B, tile_t, cfg, use_bf16):
    """content_rows: (T*B, C); valid_comb: (T*2B, 1) -> (yf, yb) each (T*B, H)."""
    rows, C = content_rows.shape
    H = lp['wh_cat'].shape[0]
    G = 4 * H
    chunk_rows = tile_t * B
    nc = T // tile_t

    wi = lp['wi_cat'].astype(jnp.bfloat16) if use_bf16 else lp['wi_cat']
    wh = lp['wh_cat'].astype(jnp.bfloat16) if use_bf16 else lp['wh_cat']

    # (1) input projection for both directions, hoisted out of the recurrence.
    tile_r = _pick_tile_rows(rows, chunk_rows, cfg["tile_rows_target"])
    gxf, gxb = pl.pallas_call(
        _lstm_inproj_kernel,
        out_shape=(jax.ShapeDtypeStruct((rows, G), jnp.float32),
                   jax.ShapeDtypeStruct((rows, G), jnp.float32)),
        grid=(rows // tile_r,),
        in_specs=[pl.BlockSpec((tile_r, C), lambda i: (i, 0)),
                  pl.BlockSpec((C, 2 * G), lambda i: (0, 0))],
        out_specs=(pl.BlockSpec((tile_r, G), lambda i: (i, 0)),
                   pl.BlockSpec((tile_r, G), lambda i: (i, 0))),
        compiler_params=pltpu.CompilerParams(
            dimension_semantics=("parallel",),
            vmem_limit_bytes=cfg["vmem_limit"]),
    )(content_rows, wi)

    # (2) fused bidirectional recurrence, streamed in time chunks; state in scratch.
    yf, yb = pl.pallas_call(
        _bilstm_rec_kernel,
        out_shape=(jax.ShapeDtypeStruct((rows, H), jnp.float32),
                   jax.ShapeDtypeStruct((rows, H), jnp.float32)),
        grid=(nc,),
        in_specs=[pl.BlockSpec((chunk_rows, G), lambda i: (i, 0)),
                  pl.BlockSpec((chunk_rows, G), lambda i: (nc - 1 - i, 0)),
                  pl.BlockSpec((tile_t * 2 * B, 1), lambda i: (i, 0)),
                  pl.BlockSpec((H, 2 * G), lambda i: (0, 0)),
                  pl.BlockSpec((2 * B, G), lambda i: (0, 0))],
        out_specs=(pl.BlockSpec((chunk_rows, H), lambda i: (i, 0)),
                   pl.BlockSpec((chunk_rows, H), lambda i: (nc - 1 - i, 0))),
        scratch_shapes=[pltpu.VMEM((2 * B, H), jnp.float32),
                        pltpu.VMEM((2 * B, H), jnp.float32),
                        pltpu.VMEM((2 * B, G), jnp.float32)],
        compiler_params=pltpu.CompilerParams(
            dimension_semantics=("arbitrary",),
            vmem_limit_bytes=cfg["vmem_limit"]),
    )(gxf, gxb, valid_comb, wh, bias_comb)
    return yf, yb


def adaln(yf, yb, gamma, beta, B, tile_t, cfg):
    rows, H = yf.shape
    C = 2 * H
    tile_r = _pick_tile_rows(rows, tile_t * B, cfg["tile_rows_target"])
    nb = rows // tile_r
    # gamma/beta per row (row j of any block -> batch j % B); resident (constant map).
    gamma_rows = jnp.tile(gamma, (tile_r // B, 1))
    beta_rows = jnp.tile(beta, (tile_r // B, 1))
    return pl.pallas_call(
        _adaln_kernel,
        out_shape=jax.ShapeDtypeStruct((rows, C), jnp.float32),
        grid=(nb,),
        in_specs=[pl.BlockSpec((tile_r, H), lambda i: (i, 0)),
                  pl.BlockSpec((tile_r, H), lambda i: (i, 0)),
                  pl.BlockSpec((tile_r, C), lambda i: (0, 0)),
                  pl.BlockSpec((tile_r, C), lambda i: (0, 0))],
        out_specs=pl.BlockSpec((tile_r, C), lambda i: (i, 0)),
        compiler_params=pltpu.CompilerParams(
            dimension_semantics=("parallel",),
            vmem_limit_bytes=cfg["vmem_limit"]),
    )(yf, yb, gamma_rows, beta_rows)


def duration_head(yf, yb, dp, B, tile_t, cfg):
    rows, H = yf.shape
    tile_r = _pick_tile_rows(rows, tile_t * B, cfg["tile_rows_target"])
    nb = rows // tile_r
    return pl.pallas_call(
        _duration_kernel,
        out_shape=jax.ShapeDtypeStruct((rows, 1), jnp.float32),
        grid=(nb,),
        in_specs=[pl.BlockSpec((tile_r, H), lambda i: (i, 0)),
                  pl.BlockSpec((tile_r, H), lambda i: (i, 0)),
                  pl.BlockSpec((1, H), lambda i: (0, 0)),
                  pl.BlockSpec((1, H), lambda i: (0, 0)),
                  pl.BlockSpec((1, 1), lambda i: (0, 0))],
        out_specs=pl.BlockSpec((tile_r, 1), lambda i: (i, 0)),
        compiler_params=pltpu.CompilerParams(
            dimension_semantics=("parallel",),
            vmem_limit_bytes=cfg["vmem_limit"]),
    )(yf, yb, dp['wf'], dp['wb'], dp['b'])


def en_bmm(content_bct, style_col, valid_b1t, alignment, cfg):
    """(B,C,T) content + (B,S,1) style + (B,1,T) valid + (B,T,Ta) -> (B, C+S, Ta)."""
    B, C, T = content_bct.shape
    S = style_col.shape[1]
    Ta = alignment.shape[2]
    return pl.pallas_call(
        _en_kernel,
        out_shape=jax.ShapeDtypeStruct((B, C + S, Ta), jnp.float32),
        grid=(B,),
        in_specs=[pl.BlockSpec((1, C, T), lambda b: (b, 0, 0)),
                  pl.BlockSpec((1, S, 1), lambda b: (b, 0, 0)),
                  pl.BlockSpec((1, 1, T), lambda b: (b, 0, 0)),
                  pl.BlockSpec((1, T, Ta), lambda b: (b, 0, 0))],
        out_specs=pl.BlockSpec((1, C + S, Ta), lambda b: (b, 0, 0)),
        compiler_params=pltpu.CompilerParams(
            dimension_semantics=("parallel",),
            vmem_limit_bytes=cfg["vmem_limit"]),
    )(content_bct, style_col, valid_b1t, alignment)


# ----------------------------------------------------------------------------
# Parameter init (deterministic, synthetic; content/style input weights split so
# the time-invariant style term can be folded into the per-batch gate bias)
# ----------------------------------------------------------------------------

def _init_lstm_params(key, in_dim, style_dim, hidden, scale=0.1):
    ks = jax.random.split(key, 10)
    w = lambda k, s: jax.random.normal(k, s, jnp.float32) * scale
    G = 4 * hidden
    return {
        # content-input weights, [forward | backward] on the gate axis
        'wi_cat': jnp.concatenate([w(ks[0], (in_dim, G)), w(ks[1], (in_dim, G))], axis=1),
        # style-input weights (time-invariant -> folded into the gate bias)
        'w_sty': jnp.concatenate([w(ks[2], (style_dim, G)), w(ks[3], (style_dim, G))], axis=1),
        # combined b_ih + b_hh per direction
        'b': jnp.concatenate([w(ks[4], (1, G)) + w(ks[5], (1, G)),
                              w(ks[6], (1, G)) + w(ks[7], (1, G))], axis=1),
        # hidden weights, [forward | backward] on the gate axis (fused per-step matmul)
        'wh_cat': jnp.concatenate([w(ks[8], (hidden, G)), w(ks[9], (hidden, G))], axis=1),
    }


def init_params(key, style_dim, d_hid, nlayers, scale=0.1):
    keys = jax.random.split(key, 2 * nlayers + 2)
    H = d_hid // 2
    enc_layers = []
    for l in range(nlayers):
        lstm_p = _init_lstm_params(keys[2 * l], d_hid, style_dim, H, scale)
        k1, k2 = jax.random.split(keys[2 * l + 1])
        adaln_p = {'w': jax.random.normal(k1, (style_dim, 2 * d_hid), jnp.float32) * scale,
                   'b': jax.random.normal(k2, (1, 2 * d_hid), jnp.float32) * scale}
        enc_layers.append({'lstm': lstm_p, 'adaln': adaln_p})
    lstm_p = _init_lstm_params(keys[-2], d_hid, style_dim, H, scale)
    kd1, kd2 = jax.random.split(keys[-1])
    dur_p = {'wf': jax.random.normal(kd1, (1, H), jnp.float32) * scale,
             'wb': jax.random.normal(jax.random.fold_in(kd1, 1), (1, H), jnp.float32) * scale,
             'b': jax.random.normal(kd2, (1, 1), jnp.float32) * scale}
    return {'enc_layers': enc_layers, 'lstm': lstm_p, 'dur': dur_p}
    # TODO(synk): F0/N AdainResBlk1d + 1x1 conv heads belong to F0Ntrain(), not forward().


# ----------------------------------------------------------------------------
# Forward pass (mirrors ProsodyPredictor.forward, eval mode)
# ----------------------------------------------------------------------------

def length_to_mask(lengths, max_len):
    idx = jnp.arange(max_len, dtype=lengths.dtype)[None, :]
    return (idx + 1) > lengths[:, None]        # True = padded position


def prosody_predictor_forward(texts, style, text_lengths, alignment, m, params,
                              use_bf16_matmul=False):
    """texts: (B, d_hid, T) [NCT]; style: (B, S); alignment: (B, T, Ta); m: (B, T) bool."""
    B, d_hid, T = texts.shape
    H = d_hid // 2
    cfg = _chip_config()
    tile_t = _pick_tile_t(T, cfg["tile_t_target"])
    assert T % tile_t == 0, "tile_t must divide T"

    valid_bt = (~m).astype(jnp.float32)                     # (B, T) 1.0 where t < length
    v_tb = jnp.transpose(valid_bt)                          # (T, B)
    # combined validity rows: [fwd valid(s) ; bwd valid(T-1-s)] per time step
    valid_comb = jnp.concatenate([v_tb, v_tb[::-1]], axis=1).reshape(T * 2 * B, 1)

    # All sequence activations in dense 2-D (T*B, channels) rows (t-major, b-minor).
    content = jnp.transpose(texts, (2, 0, 1)).reshape(T * B, d_hid)

    # ---- DurationEncoder: per layer LSTM -> AdaLN (style folded into gate bias) ----
    for layer in params['enc_layers']:
        lp, ap = layer['lstm'], layer['adaln']
        sb = linear(style, lp['w_sty'], lp['b'], cfg)        # (B, 8H) gate biases, both dirs
        bias_comb = jnp.concatenate([sb[:, :4 * H], sb[:, 4 * H:]], axis=0)   # (2B, 4H)
        yf, yb = bilstm(content, valid_comb, lp, bias_comb, T, B, tile_t, cfg,
                        use_bf16_matmul)
        gbeta = linear(style, ap['w'], ap['b'], cfg)         # (B, 2*d_hid) gamma/beta
        content = adaln(yf, yb, gbeta[:, :d_hid], gbeta[:, d_hid:], B, tile_t, cfg)
        # dropout = identity (eval)

    # ---- final bidirectional LSTM over d = [content | style] ----
    lp = params['lstm']
    sb = linear(style, lp['w_sty'], lp['b'], cfg)
    bias_comb = jnp.concatenate([sb[:, :4 * H], sb[:, 4 * H:]], axis=0)
    yf, yb = bilstm(content, valid_comb, lp, bias_comb, T, B, tile_t, cfg,
                    use_bf16_matmul)

    # ---- duration head (dropout p=0.5, training=False -> identity) ----
    dur_rows = duration_head(yf, yb, params['dur'], B, tile_t, cfg)    # (T*B, 1)
    duration = jnp.transpose(dur_rows.reshape(T, B))                   # (B, T)

    # ---- en = d^T @ alignment, mask + style-concat fused; standard contraction ----
    content_bct = jnp.transpose(content.reshape(T, B, d_hid), (1, 2, 0))   # (B, C, T)
    en = en_bmm(content_bct, style[:, :, None], valid_bt[:, None, :], alignment, cfg)
    return duration, en


# ----------------------------------------------------------------------------
# Demo
# ----------------------------------------------------------------------------

if __name__ == "__main__":
    B, d_hid, style_dim, nlayers, T, Ta = 2, 32, 16, 2, 8, 12

    key = jax.random.PRNGKey(0)
    k_texts, k_style, k_align, k_params = jax.random.split(key, 4)

    texts = jax.random.normal(k_texts, (B, d_hid, T), jnp.float32)   # (B, C, T) PyTorch NCT
    style = jax.random.normal(k_style, (B, style_dim), jnp.float32)
    text_lengths = jnp.array([T, T - 2], jnp.int32)
    alignment = jax.random.normal(k_align, (B, T, Ta), jnp.float32)
    m = length_to_mask(text_lengths, T)                               # (B, T) bool, True = pad

    params = init_params(k_params, style_dim, d_hid, nlayers)

    duration, en = prosody_predictor_forward(texts, style, text_lengths, alignment, m, params)
    jax.block_until_ready((duration, en))

    assert duration.shape == (B, T)
    assert en.shape == (B, d_hid + style_dim, Ta)
    assert bool(jnp.all(jnp.isfinite(duration))) and bool(jnp.all(jnp.isfinite(en)))
    print("KERNEL_OK")
</pallas_src>

<mosaic_0001>
module attributes {stable_mosaic.version = 11 : i64} {
  func.func @_linear_kernel(%arg0: memref<2x16xf32, #tpu.memory_space<vmem>>, %arg1: memref<16x128xf32, #tpu.memory_space<vmem>>, %arg2: memref<1x128xf32, #tpu.memory_space<vmem>>, %arg3: memref<2x128xf32, #tpu.memory_space<vmem>>) attributes {dimension_semantics = [], scalar_prefetch = 0 : i64, scratch_operands = 0 : i64, tpu.core_type = #tpu.core_type<tc>} {
    %c0 = arith.constant 0 : index
    %c0_0 = arith.constant 0 : index
    %0 = vector.load %arg0[%c0, %c0_0] : memref<2x16xf32, #tpu.memory_space<vmem>>, vector<2x16xf32>
    %c0_1 = arith.constant 0 : index
    %c0_2 = arith.constant 0 : index
    %1 = vector.load %arg1[%c0_1, %c0_2] : memref<16x128xf32, #tpu.memory_space<vmem>>, vector<16x128xf32>
    %cst = arith.constant dense<0.000000e+00> : vector<2x128xf32>
    %2 = tpu.matmul %0, %1, %cst {dimension_numbers = #tpu.dot_dimension_numbers<[1], [0], [0], [1], [0, 0, 1, 1], [], []>} : vector<2x16xf32>, vector<16x128xf32>, vector<2x128xf32> -> vector<2x128xf32>
    %c0_3 = arith.constant 0 : index
    %c0_4 = arith.constant 0 : index
    %3 = vector.load %arg2[%c0_3, %c0_4] : memref<1x128xf32, #tpu.memory_space<vmem>>, vector<1x128xf32>
    %4 = vector.broadcast %3 : vector<1x128xf32> to vector<2x128xf32>
    %5 = arith.addf %2, %4 : vector<2x128xf32>
    %c0_5 = arith.constant 0 : index
    %c0_6 = arith.constant 0 : index
    %6 = vector.load %arg3[%c0_5, %c0_6] : memref<2x128xf32, #tpu.memory_space<vmem>>, vector<2x128xf32>
    tpu.vector_store %arg3[%c0_5, %c0_6], %5 {strides = array<i32>} : memref<2x128xf32, #tpu.memory_space<vmem>>, vector<2x128xf32>,
    return
  }
}

</mosaic_0001>

<llo_original>
// kernel: tpu_custom_call.1
$region0: #{tpu_custom_call.1}
  #allocation0 [shape = 'u32[]', space=smem, size = 0x4, offset = 0x4, fixed_abs, tag = 'smem constant byte address 0x4 - core index']
  #allocation1 [shape = 'u32[144,128]{1,0:T(1,128)}', space=vmem, size = 0x12000, scoped, tag = 'internal scratch']
  %s0 = inlined_call_operand.hbm [shape: f32[2,16], index: 0, kind: input, shape index: {}]
  %s1 = inlined_call_operand.hbm [shape: f32[16,128], index: 1, kind: input, shape index: {}]
  %s2 = inlined_call_operand.vmem [shape: f32[1,128], index: 2, kind: input, shape index: {}]
  %s3 = inlined_call_operand.hbm [shape: f32[2,128], index: 3, kind: output, shape index: {}]
  %s4 = sld [smem:[#allocation0]]
  $region30: #{tpu_custom_call.1} parent=0
    _
  %s6 = ssub.s32 1, %s4
  %s7 = scalar_select 0, %s6, %s4
  $region1: #{tpu_custom_call.1} parent=0
    #allocation2 [shape = 'u8[1024]{0}', space=vmem, size = 0x400, scoped, tag = 'input window, operand 0, single buffered']
    #allocation3 [shape = 's32[1]{0}', space=sflag, size = 0x4, scoped, tag = 'scoped memory for tpu_custom_call.1']
    #allocation4 [shape = 's32[1]{0}', space=sflag, size = 0x4, scoped, tag = 'scoped memory for tpu_custom_call.1']
    #allocation5 [shape = 'u8[8192]{0}', space=vmem, size = 0x2000, scoped, tag = 'input window, operand 1, single buffered']
    #allocation6 [shape = 's32[1]{0}', space=sflag, size = 0x4, scoped, tag = 'scoped memory for tpu_custom_call.1']
    #allocation7 [shape = 'u8[1024]{0}', space=vmem, size = 0x400, scoped, tag = 'output window, operand 0, single buffered']
    %8 = vsyncpa [#allocation3], 0
    %9 = vsyncpa [#allocation6], 0
    %10 = vsyncpa [#allocation4], 0
    // Predicated region
    $region2: #{tpu_custom_call.1} parent=1 // pred_check
      _
    $region3: #{tpu_custom_call.1} parent=1 // pred_check_branch
      %12 = sbr.rel (0) target = $region5
    $region4: #{tpu_custom_call.1} parent=1 // pred_region
      %s14 = ssub.s32 32, 32
      %15 = vsyncadd [#allocation3], %s14
      %s17 = sshll.u32 [#allocation2], 4
      %s18 = int_to_ptr.vmem [resolvable:$true] %s17
      %20 = dma.hbm_to_vmem [thread:$0]  %s0, 32, %s18, [#allocation3]
    $region5: #{tpu_custom_call.1} parent=1 // pred_fallthru
      _
    // Predicated region
    $region6: #{tpu_custom_call.1} parent=1 // pred_check
      _
    $region7: #{tpu_custom_call.1} parent=1 // pred_check_branch
      %22 = sbr.rel (0) target = $region9
    $region8: #{tpu_custom_call.1} parent=1 // pred_region
      %s24 = ssub.s32 256, 256
      %25 = vsyncadd [#allocation6], %s24
      %s26 = sshll.u32 [#allocation5], 4
      %s27 = int_to_ptr.vmem [resolvable:$true] %s26
      %32 = dma.hbm_to_vmem [thread:$0]  %s1, 256, %s27, [#allocation6], 128, 128, 8
    $region9: #{tpu_custom_call.1} parent=1 // pred_fallthru
      _
    // Predicated region
    $region10: #{tpu_custom_call.1} parent=1 // pred_check
      _
    $region11: #{tpu_custom_call.1} parent=1 // pred_check_branch
      %34 = sbr.rel (0) target = $region13
    $region12: #{tpu_custom_call.1} parent=1 // pred_region
      _
    $region13: #{tpu_custom_call.1} parent=1 // pred_fallthru
      _
    // Predicated region
    $region14: #{tpu_custom_call.1} parent=1 // pred_check
      _
    $region15: #{tpu_custom_call.1} parent=1 // pred_check_branch
      %36 = sbr.rel (0) target = $region17
    $region16: #{tpu_custom_call.1} parent=1 // pred_region
      %37 = dma.done [#allocation3], 32
    $region17: #{tpu_custom_call.1} parent=1 // pred_fallthru
      _
    // Predicated region
    $region18: #{tpu_custom_call.1} parent=1 // pred_check
      _
    $region19: #{tpu_custom_call.1} parent=1 // pred_check_branch
      %39 = sbr.rel (0) target = $region21
    $region20: #{tpu_custom_call.1} parent=1 // pred_region
      %40 = dma.done [#allocation6], 256
    $region21: #{tpu_custom_call.1} parent=1 // pred_fallthru
      _
    %v41 = vld [vmem:[#allocation2] sm:$0x3]
    %v42 = vld [vmem:[#allocation5] sm:$0xff]
    %v43 = vld [vmem:[#allocation5 + $0x8] sm:$0xff]
    %v44 = vld [vmem:[%s2] sm:$0x1]
    %v46 = vlaneseq
    %v47 = vshrl.u32 %v46, 7
    %v48 = vsub.s32 0, %v47
    %v49 = vrot.slane %v44, %v48
    %vm51 = vcmask 130048
    %v53 = vsel %vm51, %v41, 0
    %55 = vmatprep.subr.mxu0 0.0
    %56 = vmatpush1.msra.mxu0 %v42
    %57 = vmatprep.subr.mxu0 0.0
    %58 = vmatpush1.msra.mxu0 %v43
    %59 = vmatprep.subr.mxu0 0.0
    %60 = vmatpush1.msra.mxu0 0.0
    %61 = vmatprep.subr.mxu0 0.0
    %62 = vmatpush1.msra.mxu0 0.0
    %63 = vmatprep.subr.mxu0 0.0
    %64 = vmatpush1.msra.mxu0 0.0
    %65 = vmatprep.subr.mxu0 0.0
    %66 = vmatpush1.msra.mxu0 0.0
    %67 = vmatprep.subr.mxu0 0.0
    %68 = vmatpush1.msra.mxu0 0.0
    %69 = vmatprep.subr.mxu0 0.0
    %70 = vmatpush1.msra.mxu0 0.0
    %71 = vmatprep.subr.mxu0 0.0
    %72 = vmatpush1.msra.mxu0 0.0
    %73 = vmatprep.subr.mxu0 0.0
    %74 = vmatpush1.msra.mxu0 0.0
    %75 = vmatprep.subr.mxu0 0.0
    %76 = vmatpush1.msra.mxu0 0.0
    %77 = vmatprep.subr.mxu0 0.0
    %78 = vmatpush1.msra.mxu0 0.0
    %79 = vmatprep.subr.mxu0 0.0
    %80 = vmatpush1.msra.mxu0 0.0
    %81 = vmatprep.subr.mxu0 0.0
    %82 = vmatpush1.msra.mxu0 0.0
    %83 = vmatprep.subr.mxu0 0.0
    %84 = vmatpush1.msra.mxu0 0.0
    %85 = vmatprep.subr.mxu0 0.0
    %86 = vmatpush1.msra.mxu0 0.0
    %87 = vmatprep.subr.mxu0 0.0
    %88 = vmatpush1.msra.mxu0 0.0
    %89 = vmatprep.subr.mxu0 0.0
    %90 = vmatpush1.msra.mxu0 0.0
    %91 = vmatprep.subr.mxu0 0.0
    %92 = vmatpush1.msra.mxu0 0.0
    %93 = vmatprep.subr.mxu0 0.0
    %94 = vmatpush1.msra.mxu0 0.0
    %95 = vmatprep.subr.mxu0 0.0
    %96 = vmatpush1.msra.mxu0 0.0
    %97 = vmatprep.subr.mxu0 0.0
    %98 = vmatpush1.msra.mxu0 0.0
    %99 = vmatprep.subr.mxu0 0.0
    %100 = vmatpush1.msra.mxu0 0.0
    %101 = vmatprep.subr.mxu0 0.0
    %102 = vmatpush1.msra.mxu0 0.0
    %103 = vmatprep.subr.mxu0 0.0
    %104 = vmatpush1.msra.mxu0 0.0
    %105 = vmatprep.subr.mxu0 0.0
    %106 = vmatpush1.msra.mxu0 0.0
    %107 = vmatprep.subr.mxu0 0.0
    %108 = vmatpush1.msra.mxu0 0.0
    %109 = vmatprep.subr.mxu0 0.0
    %110 = vmatpush1.msra.mxu0 0.0
    %111 = vmatprep.subr.mxu0 0.0
    %112 = vmatpush1.msra.mxu0 0.0
    %113 = vmatprep.subr.mxu0 0.0
    %114 = vmatpush1.msra.mxu0 0.0
    %115 = vmatprep.subr.mxu0 0.0
    %116 = vmatpush1.msra.mxu0 0.0
    %117 = vmatprep.subr.mxu0 0.0
    %118 = vmatpush1.msra.mxu0 0.0
    %119 = vmatprep.mubr.f32.mxu0 0.0
    %120 = vmatmul.mubr.f32.gmra.mrb[0].mxu0 %v53
    %v121 = vpop.f32.mrb[0].mxu0
    %v122 = vadd.f32 %v49, %v121
    %v123 = vpop.f32.mrb[0].mxu0
    %124 = vdwg.mxu0
    %125 = vst [vmem:[#allocation7] sm:$0x3] %v122
    // Predicated region
    $region22: #{tpu_custom_call.1} parent=1 // pred_check
      _
    $region23: #{tpu_custom_call.1} parent=1 // pred_check_branch
      %127 = sbr.rel (0) target = $region25
    $region24: #{tpu_custom_call.1} parent=1 // pred_region
      %s129 = ssub.s32 32, 32
      %130 = vsyncadd [#allocation4], %s129
      %s132 = sshll.u32 [#allocation7], 4
      %s133 = int_to_ptr.vmem [resolvable:$true] %s132
      %135 = dma.vmem_to_hbm [thread:$0]  %s133, 32, %s3, [#allocation4]
    $region25: #{tpu_custom_call.1} parent=1 // pred_fallthru
      _
    // Predicated region
    $region26: #{tpu_custom_call.1} parent=1 // pred_check
      _
    $region27: #{tpu_custom_call.1} parent=1 // pred_check_branch
      %137 = sbr.rel (0) target = $region29
    $region28: #{tpu_custom_call.1} parent=1 // pred_region
      %138 = dma.done [#allocation4], 32
    $region29: #{tpu_custom_call.1} parent=1 // pred_fallthru
      _
    %139 = vsyncpa [#allocation3], 1
    %140 = vsyncpa [#allocation6], 1
    %141 = vsyncpa [#allocation4], 1

</llo_original>
